<compile_context>
chip_gen: v6e
topology: v6e:2x2x1
jax: 0.10.0
libtpu: 0.0.40
codegen_flags: <defaults>
</compile_context>

<pallas_src>
import functools

import jax
import jax.numpy as jnp
from jax import lax
from jax.experimental import pallas as pl
from jax.experimental.pallas import tpu as pltpu

_CONTRACT_LAST = (((1,), (1,)), ((), ()))  # dot_general: contract last dim of both


def _abs_part_loss_kernel(y_sm, x_ref, ycol_ref, yrow_ref, sqcol_ref, sqrow_ref,
                          out_ref, *, margin):
    """One grid step == one anchor row `a`; emits a lane-dense partial-sum row."""
    a = pl.program_id(0)
    B, _ = x_ref.shape

    x = x_ref[...]                                      # (B, D) f32 embeddings
    xa = x_ref[pl.ds(a, 1), :]                          # (1, D) anchor row
    ycol = ycol_ref[...]                                # (B, 1) labels, sublane-major
    yrow = yrow_ref[...]                                # (1, B) labels, lane-major
    sq_col = sqcol_ref[...]                             # (B, 1) ||x_b||^2
    sq_row = sqrow_ref[...]                             # (1, B) ||x_b||^2
    sq_a = sqcol_ref[pl.ds(a, 1), :]                    # (1, 1) ||x_a||^2
    y_a = y_sm[a]                                       # anchor label (SMEM scalar)
    m = jnp.float32(margin)

    # Anchor Gram row & column via two MXU mat-vecs: same values in lane-major
    # (1,B) and sublane-major (B,1) layouts, with no transposes materialized.
    g_row = lax.dot_general(xa, x, _CONTRACT_LAST, preferred_element_type=jnp.float32)
    g_col = lax.dot_general(x, xa, _CONTRACT_LAST, preferred_element_type=jnp.float32)

    # Raw euclidean distances anchor -> every sample (torch.cdist), both layouts.
    d_row = jnp.sqrt(jnp.maximum(sq_a + sq_row - 2.0 * g_row, 0.0))   # (1, B)
    d_col = jnp.sqrt(jnp.maximum(sq_a + sq_col - 2.0 * g_col, 0.0))   # (B, 1)

    # Distances between L2-normalized embeddings: ||x̂_a - x̂_b|| = sqrt(2 - 2cos).
    # rsqrt goes to the EUP slot (free alongside the VPU hinge math).
    eps = jnp.float32(1e-24)
    inv_a = lax.rsqrt(jnp.maximum(sq_a, eps))                          # (1, 1)
    inv_row = lax.rsqrt(jnp.maximum(sq_row, eps))                      # (1, B)
    inv_col = lax.rsqrt(jnp.maximum(sq_col, eps))                      # (B, 1)
    dn_row = jnp.sqrt(jnp.maximum(2.0 - 2.0 * g_row * (inv_a * inv_row), 0.0))
    dn_col = jnp.sqrt(jnp.maximum(2.0 - 2.0 * g_col * (inv_a * inv_col), 0.0))

    idx_col = lax.broadcasted_iota(jnp.int32, (B, 1), 0)

    # ---- loss1: all (a, p, n) triplets with this anchor --------------------
    pos_col = ((ycol == y_a) & (idx_col != a)).astype(jnp.float32)    # (B, 1)  positives p
    neg_row = (yrow != y_a).astype(jnp.float32)                       # (1, B)  negatives n
    h1 = jnp.maximum(dn_col - dn_row + m, 0.0)                        # (B, B): [p, n]
    l1 = jnp.sum(h1 * pos_col * neg_row)
    c1 = jnp.sum(pos_col) * jnp.sum(neg_row)                          # triplet count

    # ---- loss2: ordinal hinge, symmetrized so only the anchor row is needed.
    # Sum over (j, k) with label[j] strictly between label[a] and label[k] of
    # relu(m + D[a,j] - D[a,k]); over both orientations this equals the
    # original relu(m-D[i,k]+D[i,j]) + relu(m-D[k,i]+D[k,j]) per sorted combo.
    lt_col = (ycol > y_a).astype(jnp.float32)     # label(a) < label(j)
    gt_col = (ycol < y_a).astype(jnp.float32)     # label(a) > label(j)
    ltb = (ycol < yrow).astype(jnp.float32)       # label(j) < label(k)   (B, B)
    gtb = (ycol > yrow).astype(jnp.float32)       # label(j) > label(k)
    m2 = lt_col * ltb + gt_col * gtb              # (B, B): [j, k]
    h2 = jnp.maximum(d_col - d_row + m, 0.0)      # relu(m + D[a,j] - D[a,k])
    l2 = jnp.sum(h2 * m2)
    c2 = jnp.sum(m2)                              # = 2 * (#sorted combos touching a)

    # Lane-dense (1, 128) partial-sum row: [l1, c1, l2, c2, 0, ...] -> unmasked vst.
    lane = lax.broadcasted_iota(jnp.int32, (1, 128), 1)
    packed = (jnp.where(lane == 0, l1, 0.0) + jnp.where(lane == 1, c1, 0.0)
              + jnp.where(lane == 2, l2, 0.0) + jnp.where(lane == 3, c2, 0.0))
    out_ref[...] = packed.reshape(1, 1, 128)


def abs_part_loss(x, y, margin):
    """x: (B, D) float embeddings, y: (B,) int labels -> scalar f32 loss."""
    B, D = x.shape
    x32 = x.astype(jnp.float32)
    y_i32 = y.astype(jnp.int32)
    y_col = y_i32.reshape(B, 1)
    y_row = y_i32.reshape(1, B)
    # Anchor-independent squared norms: computed once here instead of B times
    # inside the kernel; passed in both layouts to avoid in-kernel transposes.
    sq = jnp.sum(x32 * x32, axis=1)
    sq_col = sq.reshape(B, 1)
    sq_row = sq.reshape(1, B)

    parts = pl.pallas_call(
        functools.partial(_abs_part_loss_kernel, margin=float(margin)),
        out_shape=jax.ShapeDtypeStruct((B, 1, 128), jnp.float32),
        grid_spec=pltpu.PrefetchScalarGridSpec(
            num_scalar_prefetch=1,                 # y -> SMEM, read per-anchor scalar
            grid=(B,),                             # one anchor row per grid step
            in_specs=[
                pl.BlockSpec((B, D), lambda a, ys: (0, 0)),   # embeddings, pinned in VMEM
                pl.BlockSpec((B, 1), lambda a, ys: (0, 0)),   # labels, sublane-major
                pl.BlockSpec((1, B), lambda a, ys: (0, 0)),   # labels, lane-major
                pl.BlockSpec((B, 1), lambda a, ys: (0, 0)),   # ||x||^2, sublane-major
                pl.BlockSpec((1, B), lambda a, ys: (0, 0)),   # ||x||^2, lane-major
            ],
            out_specs=pl.BlockSpec((1, 1, 128), lambda a, ys: (a, 0, 0)),
        ),
        compiler_params=pltpu.CompilerParams(
            dimension_semantics=("parallel",),     # anchor axis shards across TCs (v7x)
            vmem_limit_bytes=32 * 1024 * 1024,
        ),
    )(y_i32, x32, y_col, y_row, sq_col, sq_row)

    sums = jnp.sum(parts, axis=(0, 1))             # (128,) totals
    l1_sum, c1 = sums[0], sums[1]
    l2_sum, c2x2 = sums[2], sums[3]                # c2x2 == 2 * (#(i,j,k) combos)
    # Guarded means: degenerate batches (no triplets / <3 distinct labels)
    # return 0 for that term instead of PyTorch's NaN-on-empty-mean.
    loss1 = l1_sum / jnp.maximum(c1, 1.0)          # MeanReducer over all triplets
    loss2 = 2.0 * l2_sum / jnp.maximum(c2x2, 1.0)  # mean over all sorted combos
    return loss1 + loss2


def _reference(x, y, margin):
    """Pure-JAX reference mirroring the PyTorch forward (for sanity check)."""
    B = x.shape[0]

    def cdist(a):
        sq = jnp.sum(a * a, axis=-1)
        d2 = sq[:, None] + sq[None, :] - 2.0 * (a @ a.T)
        return jnp.sqrt(jnp.maximum(d2, 0.0))

    xn = x / jnp.maximum(jnp.linalg.norm(x, axis=-1, keepdims=True), 1e-12)
    Dn, D = cdist(xn), cdist(x)
    idx = jnp.arange(B)

    # loss1: all triplets (a, p, n)
    same = y[:, None] == y[None, :]
    pos = same & (idx[:, None] != idx[None, :])
    neg = ~same
    m1 = pos[:, :, None] & neg[:, None, :]
    t1 = jnp.maximum(Dn[:, :, None] - Dn[:, None, :] + margin, 0.0)
    c1 = jnp.sum(m1)
    loss1 = jnp.sum(jnp.where(m1, t1, 0.0)) / jnp.maximum(c1, 1)

    # loss2: (i, j, k) with label[i] < label[j] < label[k]
    yi, yj, yk = y[:, None, None], y[None, :, None], y[None, None, :]
    m2 = (yi < yj) & (yj < yk)
    termA = jnp.maximum(margin - D[:, None, :] + D[:, :, None], 0.0)   # m - D[i,k] + D[i,j]
    termB = jnp.maximum(margin - D[:, None, :] + D[None, :, :], 0.0)   # m - D[k,i] + D[k,j]
    c2 = jnp.sum(m2)
    loss2 = jnp.sum(jnp.where(m2, termA + termB, 0.0)) / jnp.maximum(c2, 1)
    return loss1 + loss2


if __name__ == "__main__":
    batch, dim, num_classes, margin = 16, 32, 4, 0.2

    key = jax.random.PRNGKey(0)
    x = jax.random.normal(key, (batch, dim), dtype=jnp.float32)
    # Deterministic labels: 4 classes x 4 samples -> loss1 has positive pairs,
    # loss2 has >=3 distinct (ordered) classes.
    y = jnp.arange(batch, dtype=jnp.int32) % num_classes

    loss = jax.block_until_ready(abs_part_loss(x, y, margin))
    ref = jax.block_until_ready(_reference(x, y, margin))

    assert jnp.isfinite(loss), "kernel produced non-finite loss"
    assert abs(float(loss) - float(ref)) <= 1e-3 * max(1.0, abs(float(ref))), (
        float(loss), float(ref))
    print("KERNEL_OK")
</pallas_src>

<mosaic_0001>
module attributes {stable_mosaic.version = 11 : i64} {
  func.func @_abs_part_loss_kernel(%arg0: i32, %arg1: memref<16xi32, #tpu.memory_space<smem>>, %arg2: memref<16x32xf32, #tpu.memory_space<vmem>>, %arg3: memref<16x1xi32, #tpu.memory_space<vmem>>, %arg4: memref<1x16xi32, #tpu.memory_space<vmem>>, %arg5: memref<16x1xf32, #tpu.memory_space<vmem>>, %arg6: memref<1x16xf32, #tpu.memory_space<vmem>>, %arg7: memref<1x1x128xf32, #tpu.memory_space<vmem>>) attributes {dimension_semantics = [#tpu.dimension_semantics<parallel>], iteration_bounds = array<i64: 16>, scalar_prefetch = 1 : i64, scratch_operands = 0 : i64, tpu.core_type = #tpu.core_type<tc>, window_params = [{pipeline_mode = #tpu.pipeline_mode<synchronous>, transform_indices = @transform_0, window_bounds = array<i64: 16, 32>}, {pipeline_mode = #tpu.pipeline_mode<synchronous>, transform_indices = @transform_1, window_bounds = array<i64: 16, 1>}, {pipeline_mode = #tpu.pipeline_mode<synchronous>, transform_indices = @transform_2, window_bounds = array<i64: 1, 16>}, {pipeline_mode = #tpu.pipeline_mode<synchronous>, transform_indices = @transform_3, window_bounds = array<i64: 16, 1>}, {pipeline_mode = #tpu.pipeline_mode<synchronous>, transform_indices = @transform_4, window_bounds = array<i64: 1, 16>}, {transform_indices = @transform_5, window_bounds = array<i64: 1, 1, 128>}]} {
    %c0 = arith.constant 0 : index
    %c0_0 = arith.constant 0 : index
    %0 = vector.load %arg2[%c0, %c0_0] : memref<16x32xf32, #tpu.memory_space<vmem>>, vector<16x32xf32>
    %1 = arith.index_cast %arg0 : i32 to index
    %c0_1 = arith.constant 0 : index
    %2 = vector.load %arg2[%1, %c0_1] : memref<16x32xf32, #tpu.memory_space<vmem>>, vector<1x32xf32>
    %c0_2 = arith.constant 0 : index
    %c0_3 = arith.constant 0 : index
    %3 = vector.load %arg3[%c0_2, %c0_3] : memref<16x1xi32, #tpu.memory_space<vmem>>, vector<16x1xi32>
    %c0_4 = arith.constant 0 : index
    %c0_5 = arith.constant 0 : index
    %4 = vector.load %arg4[%c0_4, %c0_5] : memref<1x16xi32, #tpu.memory_space<vmem>>, vector<1x16xi32>
    %c0_6 = arith.constant 0 : index
    %c0_7 = arith.constant 0 : index
    %5 = vector.load %arg5[%c0_6, %c0_7] : memref<16x1xf32, #tpu.memory_space<vmem>>, vector<16x1xf32>
    %c0_8 = arith.constant 0 : index
    %c0_9 = arith.constant 0 : index
    %6 = vector.load %arg6[%c0_8, %c0_9] : memref<1x16xf32, #tpu.memory_space<vmem>>, vector<1x16xf32>
    %7 = arith.index_cast %arg0 : i32 to index
    %c0_10 = arith.constant 0 : index
    %8 = vector.load %arg5[%7, %c0_10] : memref<16x1xf32, #tpu.memory_space<vmem>>, vector<1x1xf32>
    %9 = arith.index_cast %arg0 : i32 to index
    %10 = memref.load %arg1[%9] : memref<16xi32, #tpu.memory_space<smem>>
    %cst = arith.constant dense<0.000000e+00> : vector<1x16xf32>
    %11 = tpu.matmul %2, %0, %cst {dimension_numbers = #tpu.dot_dimension_numbers<[1], [1], [0], [0], [0, 0, 1, 0], [], []>} : vector<1x32xf32>, vector<16x32xf32>, vector<1x16xf32> -> vector<1x16xf32>
    %cst_11 = arith.constant dense<0.000000e+00> : vector<16x1xf32>
    %12 = tpu.matmul %0, %2, %cst_11 {dimension_numbers = #tpu.dot_dimension_numbers<[1], [1], [0], [0], [0, 0, 1, 0], [], []>} : vector<16x32xf32>, vector<1x32xf32>, vector<16x1xf32> -> vector<16x1xf32>
    %13 = vector.broadcast %8 : vector<1x1xf32> to vector<1x16xf32>
    %14 = arith.addf %13, %6 : vector<1x16xf32>
    %cst_12 = arith.constant 2.000000e+00 : f32
    %15 = vector.broadcast %cst_12 : f32 to vector<1x16xf32>
    %16 = arith.mulf %15, %11 : vector<1x16xf32>
    %17 = arith.subf %14, %16 : vector<1x16xf32>
    %cst_13 = arith.constant 0.000000e+00 : f32
    %18 = vector.broadcast %cst_13 : f32 to vector<1x16xf32>
    %19 = arith.maximumf %17, %18 : vector<1x16xf32>
    %20 = math.sqrt %19 : vector<1x16xf32>
    %21 = vector.broadcast %8 : vector<1x1xf32> to vector<16x1xf32>
    %22 = arith.addf %21, %5 : vector<16x1xf32>
    %cst_14 = arith.constant 2.000000e+00 : f32
    %23 = vector.broadcast %cst_14 : f32 to vector<16x1xf32>
    %24 = arith.mulf %23, %12 : vector<16x1xf32>
    %25 = arith.subf %22, %24 : vector<16x1xf32>
    %cst_15 = arith.constant 0.000000e+00 : f32
    %26 = vector.broadcast %cst_15 : f32 to vector<16x1xf32>
    %27 = arith.maximumf %25, %26 : vector<16x1xf32>
    %28 = math.sqrt %27 : vector<16x1xf32>
    %cst_16 = arith.constant 1.000000e-24 : f32
    %29 = vector.broadcast %cst_16 : f32 to vector<1x1xf32>
    %30 = arith.maximumf %8, %29 : vector<1x1xf32>
    %31 = math.rsqrt %30 : vector<1x1xf32>
    %cst_17 = arith.constant 1.000000e-24 : f32
    %32 = vector.broadcast %cst_17 : f32 to vector<1x16xf32>
    %33 = arith.maximumf %6, %32 : vector<1x16xf32>
    %34 = math.rsqrt %33 : vector<1x16xf32>
    %cst_18 = arith.constant 1.000000e-24 : f32
    %35 = vector.broadcast %cst_18 : f32 to vector<16x1xf32>
    %36 = arith.maximumf %5, %35 : vector<16x1xf32>
    %37 = math.rsqrt %36 : vector<16x1xf32>
    %cst_19 = arith.constant 2.000000e+00 : f32
    %38 = vector.broadcast %cst_19 : f32 to vector<1x16xf32>
    %39 = arith.mulf %38, %11 : vector<1x16xf32>
    %40 = vector.broadcast %31 : vector<1x1xf32> to vector<1x16xf32>
    %41 = arith.mulf %40, %34 : vector<1x16xf32>
    %42 = arith.mulf %39, %41 : vector<1x16xf32>
    %cst_20 = arith.constant 2.000000e+00 : f32
    %43 = vector.broadcast %cst_20 : f32 to vector<1x16xf32>
    %44 = arith.subf %43, %42 : vector<1x16xf32>
    %cst_21 = arith.constant 0.000000e+00 : f32
    %45 = vector.broadcast %cst_21 : f32 to vector<1x16xf32>
    %46 = arith.maximumf %44, %45 : vector<1x16xf32>
    %47 = math.sqrt %46 : vector<1x16xf32>
    %cst_22 = arith.constant 2.000000e+00 : f32
    %48 = vector.broadcast %cst_22 : f32 to vector<16x1xf32>
    %49 = arith.mulf %48, %12 : vector<16x1xf32>
    %50 = vector.broadcast %31 : vector<1x1xf32> to vector<16x1xf32>
    %51 = arith.mulf %50, %37 : vector<16x1xf32>
    %52 = arith.mulf %49, %51 : vector<16x1xf32>
    %cst_23 = arith.constant 2.000000e+00 : f32
    %53 = vector.broadcast %cst_23 : f32 to vector<16x1xf32>
    %54 = arith.subf %53, %52 : vector<16x1xf32>
    %cst_24 = arith.constant 0.000000e+00 : f32
    %55 = vector.broadcast %cst_24 : f32 to vector<16x1xf32>
    %56 = arith.maximumf %54, %55 : vector<16x1xf32>
    %57 = math.sqrt %56 : vector<16x1xf32>
    %58 = tpu.iota {dimensions = array<i32: 0>} : vector<16x1xi32>
    %59 = vector.broadcast %10 : i32 to vector<16x1xi32>
    %60 = arith.cmpi eq, %3, %59 : vector<16x1xi32>
    %61 = vector.broadcast %arg0 : i32 to vector<16x1xi32>
    %62 = arith.cmpi ne, %58, %61 : vector<16x1xi32>
    %63 = arith.andi %60, %62 : vector<16x1xi1>
    %64 = arith.extui %63 : vector<16x1xi1> to vector<16x1xi32>
    %65 = arith.sitofp %64 : vector<16x1xi32> to vector<16x1xf32>
    %66 = vector.broadcast %10 : i32 to vector<1x16xi32>
    %67 = arith.cmpi ne, %4, %66 : vector<1x16xi32>
    %68 = arith.extui %67 : vector<1x16xi1> to vector<1x16xi32>
    %69 = arith.sitofp %68 : vector<1x16xi32> to vector<1x16xf32>
    %70 = vector.broadcast %57 : vector<16x1xf32> to vector<16x16xf32>
    %71 = vector.broadcast %47 : vector<1x16xf32> to vector<16x16xf32>
    %72 = arith.subf %70, %71 : vector<16x16xf32>
    %cst_25 = arith.constant 2.000000e-01 : f32
    %73 = vector.broadcast %cst_25 : f32 to vector<16x16xf32>
    %74 = arith.addf %72, %73 : vector<16x16xf32>
    %cst_26 = arith.constant 0.000000e+00 : f32
    %75 = vector.broadcast %cst_26 : f32 to vector<16x16xf32>
    %76 = arith.maximumf %74, %75 : vector<16x16xf32>
    %77 = vector.broadcast %65 : vector<16x1xf32> to vector<16x16xf32>
    %78 = arith.mulf %76, %77 : vector<16x16xf32>
    %79 = vector.broadcast %69 : vector<1x16xf32> to vector<16x16xf32>
    %80 = arith.mulf %78, %79 : vector<16x16xf32>
    %81 = vector.shape_cast %80 : vector<16x16xf32> to vector<1x16x16xf32>
    %cst_27 = arith.constant dense<0.000000e+00> : vector<1xf32>
    %82 = vector.multi_reduction <add>, %81, %cst_27 [1, 2] : vector<1x16x16xf32> to vector<1xf32>
    %83 = vector.shape_cast %82 : vector<1xf32> to vector<1x1x1xf32>
    %84 = vector.extract %83[0, 0, 0] : f32 from vector<1x1x1xf32>
    %85 = vector.shape_cast %65 : vector<16x1xf32> to vector<1x16x1xf32>
    %cst_28 = arith.constant dense<0.000000e+00> : vector<1xf32>
    %86 = vector.multi_reduction <add>, %85, %cst_28 [1, 2] : vector<1x16x1xf32> to vector<1xf32>
    %87 = vector.shape_cast %86 : vector<1xf32> to vector<1x1x1xf32>
    %88 = vector.extract %87[0, 0, 0] : f32 from vector<1x1x1xf32>
    %89 = vector.shape_cast %69 : vector<1x16xf32> to vector<1x1x16xf32>
    %cst_29 = arith.constant dense<0.000000e+00> : vector<1xf32>
    %90 = vector.multi_reduction <add>, %89, %cst_29 [1, 2] : vector<1x1x16xf32> to vector<1xf32>
    %91 = vector.shape_cast %90 : vector<1xf32> to vector<1x1x1xf32>
    %92 = vector.extract %91[0, 0, 0] : f32 from vector<1x1x1xf32>
    %93 = arith.mulf %88, %92 : f32
    %94 = vector.broadcast %10 : i32 to vector<16x1xi32>
    %95 = arith.cmpi sgt, %3, %94 : vector<16x1xi32>
    %96 = arith.extui %95 : vector<16x1xi1> to vector<16x1xi32>
    %97 = arith.sitofp %96 : vector<16x1xi32> to vector<16x1xf32>
    %98 = vector.broadcast %10 : i32 to vector<16x1xi32>
    %99 = arith.cmpi slt, %3, %98 : vector<16x1xi32>
    %100 = arith.extui %99 : vector<16x1xi1> to vector<16x1xi32>
    %101 = arith.sitofp %100 : vector<16x1xi32> to vector<16x1xf32>
    %102 = vector.broadcast %3 : vector<16x1xi32> to vector<16x16xi32>
    %103 = vector.broadcast %4 : vector<1x16xi32> to vector<16x16xi32>
    %104 = arith.cmpi slt, %102, %103 : vector<16x16xi32>
    %105 = arith.extui %104 : vector<16x16xi1> to vector<16x16xi32>
    %106 = arith.sitofp %105 : vector<16x16xi32> to vector<16x16xf32>
    %107 = vector.broadcast %3 : vector<16x1xi32> to vector<16x16xi32>
    %108 = vector.broadcast %4 : vector<1x16xi32> to vector<16x16xi32>
    %109 = arith.cmpi sgt, %107, %108 : vector<16x16xi32>
    %110 = arith.extui %109 : vector<16x16xi1> to vector<16x16xi32>
    %111 = arith.sitofp %110 : vector<16x16xi32> to vector<16x16xf32>
    %112 = vector.broadcast %97 : vector<16x1xf32> to vector<16x16xf32>
    %113 = arith.mulf %112, %106 : vector<16x16xf32>
    %114 = vector.broadcast %101 : vector<16x1xf32> to vector<16x16xf32>
    %115 = arith.mulf %114, %111 : vector<16x16xf32>
    %116 = arith.addf %113, %115 : vector<16x16xf32>
    %117 = vector.broadcast %28 : vector<16x1xf32> to vector<16x16xf32>
    %118 = vector.broadcast %20 : vector<1x16xf32> to vector<16x16xf32>
    %119 = arith.subf %117, %118 : vector<16x16xf32>
    %cst_30 = arith.constant 2.000000e-01 : f32
    %120 = vector.broadcast %cst_30 : f32 to vector<16x16xf32>
    %121 = arith.addf %119, %120 : vector<16x16xf32>
    %cst_31 = arith.constant 0.000000e+00 : f32
    %122 = vector.broadcast %cst_31 : f32 to vector<16x16xf32>
    %123 = arith.maximumf %121, %122 : vector<16x16xf32>
    %124 = arith.mulf %123, %116 : vector<16x16xf32>
    %125 = vector.shape_cast %124 : vector<16x16xf32> to vector<1x16x16xf32>
    %cst_32 = arith.constant dense<0.000000e+00> : vector<1xf32>
    %126 = vector.multi_reduction <add>, %125, %cst_32 [1, 2] : vector<1x16x16xf32> to vector<1xf32>
    %127 = vector.shape_cast %126 : vector<1xf32> to vector<1x1x1xf32>
    %128 = vector.extract %127[0, 0, 0] : f32 from vector<1x1x1xf32>
    %129 = vector.shape_cast %116 : vector<16x16xf32> to vector<1x16x16xf32>
    %cst_33 = arith.constant dense<0.000000e+00> : vector<1xf32>
    %130 = vector.multi_reduction <add>, %129, %cst_33 [1, 2] : vector<1x16x16xf32> to vector<1xf32>
    %131 = vector.shape_cast %130 : vector<1xf32> to vector<1x1x1xf32>
    %132 = vector.extract %131[0, 0, 0] : f32 from vector<1x1x1xf32>
    %133 = tpu.iota {dimensions = array<i32: 1>} : vector<1x128xi32>
    %c0_i32 = arith.constant 0 : i32
    %134 = vector.broadcast %c0_i32 : i32 to vector<1x128xi32>
    %135 = arith.cmpi eq, %133, %134 : vector<1x128xi32>
    %cst_34 = arith.constant 0.000000e+00 : f32
    %136 = vector.broadcast %84 : f32 to vector<1x128xf32>
    %137 = vector.broadcast %cst_34 : f32 to vector<1x128xf32>
    %138 = arith.select %135, %136, %137 : vector<1x128xi1>, vector<1x128xf32>
    %c1_i32 = arith.constant 1 : i32
    %139 = vector.broadcast %c1_i32 : i32 to vector<1x128xi32>
    %140 = arith.cmpi eq, %133, %139 : vector<1x128xi32>
    %cst_35 = arith.constant 0.000000e+00 : f32
    %141 = vector.broadcast %93 : f32 to vector<1x128xf32>
    %142 = vector.broadcast %cst_35 : f32 to vector<1x128xf32>
    %143 = arith.select %140, %141, %142 : vector<1x128xi1>, vector<1x128xf32>
    %144 = arith.addf %138, %143 : vector<1x128xf32>
    %c2_i32 = arith.constant 2 : i32
    %145 = vector.broadcast %c2_i32 : i32 to vector<1x128xi32>
    %146 = arith.cmpi eq, %133, %145 : vector<1x128xi32>
    %cst_36 = arith.constant 0.000000e+00 : f32
    %147 = vector.broadcast %128 : f32 to vector<1x128xf32>
    %148 = vector.broadcast %cst_36 : f32 to vector<1x128xf32>
    %149 = arith.select %146, %147, %148 : vector<1x128xi1>, vector<1x128xf32>
    %150 = arith.addf %144, %149 : vector<1x128xf32>
    %c3_i32 = arith.constant 3 : i32
    %151 = vector.broadcast %c3_i32 : i32 to vector<1x128xi32>
    %152 = arith.cmpi eq, %133, %151 : vector<1x128xi32>
    %cst_37 = arith.constant 0.000000e+00 : f32
    %153 = vector.broadcast %132 : f32 to vector<1x128xf32>
    %154 = vector.broadcast %cst_37 : f32 to vector<1x128xf32>
    %155 = arith.select %152, %153, %154 : vector<1x128xi1>, vector<1x128xf32>
    %156 = arith.addf %150, %155 : vector<1x128xf32>
    %157 = vector.shape_cast %156 : vector<1x128xf32> to vector<1x1x128xf32>
    %c0_38 = arith.constant 0 : index
    %c0_39 = arith.constant 0 : index
    %c0_40 = arith.constant 0 : index
    %158 = vector.load %arg7[%c0_38, %c0_39, %c0_40] : memref<1x1x128xf32, #tpu.memory_space<vmem>>, vector<1x1x128xf32>
    tpu.vector_store %arg7[%c0_38, %c0_39, %c0_40], %157 {strides = array<i32>} : memref<1x1x128xf32, #tpu.memory_space<vmem>>, vector<1x1x128xf32>,
    return
  }
  func.func @transform_0(%arg0: i32, %arg1: memref<16xi32, #tpu.memory_space<smem>>) -> (i32, i32) {
    %c0_i32 = arith.constant 0 : i32
    %c0_i32_0 = arith.constant 0 : i32
    %c0_i32_1 = arith.constant 0 : i32
    return %c0_i32, %c0_i32_0 : i32, i32
  }
  func.func @transform_1(%arg0: i32, %arg1: memref<16xi32, #tpu.memory_space<smem>>) -> (i32, i32) {
    %c0_i32 = arith.constant 0 : i32
    %c0_i32_0 = arith.constant 0 : i32
    %c0_i32_1 = arith.constant 0 : i32
    return %c0_i32, %c0_i32_0 : i32, i32
  }
  func.func @transform_2(%arg0: i32, %arg1: memref<16xi32, #tpu.memory_space<smem>>) -> (i32, i32) {
    %c0_i32 = arith.constant 0 : i32
    %c0_i32_0 = arith.constant 0 : i32
    %c0_i32_1 = arith.constant 0 : i32
    return %c0_i32, %c0_i32_0 : i32, i32
  }
  func.func @transform_3(%arg0: i32, %arg1: memref<16xi32, #tpu.memory_space<smem>>) -> (i32, i32) {
    %c0_i32 = arith.constant 0 : i32
    %c0_i32_0 = arith.constant 0 : i32
    %c0_i32_1 = arith.constant 0 : i32
    return %c0_i32, %c0_i32_0 : i32, i32
  }
  func.func @transform_4(%arg0: i32, %arg1: memref<16xi32, #tpu.memory_space<smem>>) -> (i32, i32) {
    %c0_i32 = arith.constant 0 : i32
    %c0_i32_0 = arith.constant 0 : i32
    %c0_i32_1 = arith.constant 0 : i32
    return %c0_i32, %c0_i32_0 : i32, i32
  }
  func.func @transform_5(%arg0: i32, %arg1: memref<16xi32, #tpu.memory_space<smem>>) -> (i32, i32, i32) {
    %c0_i32 = arith.constant 0 : i32
    %c0_i32_0 = arith.constant 0 : i32
    %c0_i32_1 = arith.constant 0 : i32
    return %arg0, %c0_i32, %c0_i32_0 : i32, i32, i32
  }
}

</mosaic_0001>

<llo_original>
// kernel: tpu_custom_call.1
$region0: #{tpu_custom_call.1}
  #allocation0 [shape = 'u32[]', space=smem, size = 0x4, offset = 0x4, fixed_abs, tag = 'smem constant byte address 0x4 - core index']
  #allocation1 [shape = 'u32[144,128]{1,0:T(1,128)}', space=vmem, size = 0x12000, scoped, tag = 'internal scratch']
  #allocation2 [shape = 's32[1]{0}', space=sflag, size = 0x4, scoped, tag = 'scoped memory for tpu_custom_call.1']
  #allocation3 [shape = 'u8[512]{0}', space=smem, size = 0x200, scoped, tag = 'prefetched SMEM operand 0']
  %s0 = inlined_call_operand.vmem [shape: s32[16], index: 0, kind: input, shape index: {}]
  %s1 = inlined_call_operand.vmem [shape: f32[16,32], index: 1, kind: input, shape index: {}]
  %s2 = inlined_call_operand.vmem [shape: s32[16,1], index: 2, kind: input, shape index: {}]
  %s3 = inlined_call_operand.vmem [shape: s32[1,16], index: 3, kind: input, shape index: {}]
  %s4 = inlined_call_operand.vmem [shape: f32[16,1], index: 4, kind: input, shape index: {}]
  %s5 = inlined_call_operand.vmem [shape: f32[1,16], index: 5, kind: input, shape index: {}]
  %s6 = inlined_call_operand.hbm [shape: f32[16,1,128], index: 6, kind: output, shape index: {}]
  %s7 = sld [smem:[#allocation0]]
  $region53: #{tpu_custom_call.1} parent=0
    _
  %s9 = ssub.s32 1, %s7
  %s10 = scalar_select 0, %s9, %s7
  %s11 = sshll.u32 %s0, 4
  %s12 = int_to_ptr.vmem [resolvable:$true] %s11
  %14 = dma.vmem_to_smem %s12, 16, [#allocation3], [#allocation2]
  %15 = dma.done [#allocation2], 16
  %16 = sfence
  $region1: #{tpu_custom_call.1} parent=0
    #allocation4 [shape = 'u8[1024]{0}', space=vmem, size = 0x400, scoped, tag = 'output window, operand 0']
    #allocation5 [shape = 's32[2]{0}', space=sflag, size = 0x8, scoped, tag = 'scoped memory for tpu_custom_call.1']
    %17 = vsyncpa [#allocation5], 0
    %s18 = scalar_lea.sflag [#allocation5], 1
    %19 = vsyncpa %s18, 0
    loop: start=0, step=1, limit=18
    $region2: #{tpu_custom_call.1} parent=1 // loop_pre_header
      _
    $region3: #{tpu_custom_call.1} parent=1 // loop_header
      %s21 = sphi 0, %s25
      %p22 = scmp.ge.s32.totalorder %s21, 18
      %s29 = sphi 0, %s29
      %s31 = sphi 0, %s29
      %s32 = sphi 0, %s31
      %s46 = sphi 0, %s32
      %s50 = sphi 0, %s50
      %s52 = sphi 0, %s50
      %s53 = sphi 0, %s52
      %s67 = sphi 0, %s53
      %s71 = sphi 0, %s71
      %s73 = sphi 0, %s71
      %s74 = sphi 0, %s73
      %s88 = sphi 0, %s74
      %s92 = sphi 0, %s92
      %s94 = sphi 0, %s92
      %s95 = sphi 0, %s94
      %s109 = sphi 0, %s95
      %s113 = sphi 0, %s113
      %s115 = sphi 0, %s113
      %s116 = sphi 0, %s115
      %s130 = sphi 0, %s116
      %s136 = sphi 0, %s138
      %s139 = sphi 0, %s136
      %s140 = sphi 0, %s139
      %s156 = sphi 0, %s140
    $region4: #{tpu_custom_call.1} parent=1 // loop_header_branch
      %24 = sbr.rel (%p22) target = $region8
    $region5: #{tpu_custom_call.1} parent=1 // loop_body
      %s26 = ssub.s32 %s21, 1
      %s27 = ssub.s32 %s21, 2
      %s28 = sadd.s32 %s21, 1
      %s30 = sadd.s32 %s29, 1
      %p33 = scmp.eq.s32.totalorder %s21, 15
      %p34 = scmp.ne.s32.totalorder %s29, %s31
      %p35 = scmp.eq.s32.totalorder %s21, 0
      %p36 = por %p34, %p35
      %p37 = scmp.ne.s32.totalorder %s29, %s31
      %p38 = scmp.eq.s32.totalorder %s26, 15
      %p39 = por %p37, %p38
      %p40 = scmp.ne.s32.totalorder %s31, %s32
      %p41 = scmp.eq.s32.totalorder %s26, 0
      %p42 = por %p40, %p41
      %p43 = scmp.ne.s32.totalorder %s31, %s32
      %p44 = scmp.eq.s32.totalorder %s27, 15
      %p45 = por %p43, %p44
      %p47 = scmp.ne.s32.totalorder %s32, %s46
      %p48 = scmp.eq.s32.totalorder %s27, 0
      %p49 = por %p47, %p48
      %s51 = sadd.s32 %s50, 1
      %p54 = scmp.eq.s32.totalorder %s21, 15
      %p55 = scmp.ne.s32.totalorder %s50, %s52
      %p56 = scmp.eq.s32.totalorder %s21, 0
      %p57 = por %p55, %p56
      %p58 = scmp.ne.s32.totalorder %s50, %s52
      %p59 = scmp.eq.s32.totalorder %s26, 15
      %p60 = por %p58, %p59
      %p61 = scmp.ne.s32.totalorder %s52, %s53
      %p62 = scmp.eq.s32.totalorder %s26, 0
      %p63 = por %p61, %p62
      %p64 = scmp.ne.s32.totalorder %s52, %s53
      %p65 = scmp.eq.s32.totalorder %s27, 15
      %p66 = por %p64, %p65
      %p68 = scmp.ne.s32.totalorder %s53, %s67
      %p69 = scmp.eq.s32.totalorder %s27, 0
      %p70 = por %p68, %p69
      %s72 = sadd.s32 %s71, 1
      %p75 = scmp.eq.s32.totalorder %s21, 15
      %p76 = scmp.ne.s32.totalorder %s71, %s73
      %p77 = scmp.eq.s32.totalorder %s21, 0
      %p78 = por %p76, %p77
      %p79 = scmp.ne.s32.totalorder %s71, %s73
      %p80 = scmp.eq.s32.totalorder %s26, 15
      %p81 = por %p79, %p80
      %p82 = scmp.ne.s32.totalorder %s73, %s74
      %p83 = scmp.eq.s32.totalorder %s26, 0
      %p84 = por %p82, %p83
      %p85 = scmp.ne.s32.totalorder %s73, %s74
      %p86 = scmp.eq.s32.totalorder %s27, 15
      %p87 = por %p85, %p86
      %p89 = scmp.ne.s32.totalorder %s74, %s88
      %p90 = scmp.eq.s32.totalorder %s27, 0
      %p91 = por %p89, %p90
      %s93 = sadd.s32 %s92, 1
      %p96 = scmp.eq.s32.totalorder %s21, 15
      %p97 = scmp.ne.s32.totalorder %s92, %s94
      %p98 = scmp.eq.s32.totalorder %s21, 0
      %p99 = por %p97, %p98
      %p100 = scmp.ne.s32.totalorder %s92, %s94
      %p101 = scmp.eq.s32.totalorder %s26, 15
      %p102 = por %p100, %p101
      %p103 = scmp.ne.s32.totalorder %s94, %s95
      %p104 = scmp.eq.s32.totalorder %s26, 0
      %p105 = por %p103, %p104
      %p106 = scmp.ne.s32.totalorder %s94, %s95
      %p107 = scmp.eq.s32.totalorder %s27, 15
      %p108 = por %p106, %p107
      %p110 = scmp.ne.s32.totalorder %s95, %s109
      %p111 = scmp.eq.s32.totalorder %s27, 0
      %p112 = por %p110, %p111
      %s114 = sadd.s32 %s113, 1
      %p117 = scmp.eq.s32.totalorder %s21, 15
      %p118 = scmp.ne.s32.totalorder %s113, %s115
      %p119 = scmp.eq.s32.totalorder %s21, 0
      %p120 = por %p118, %p119
      %p121 = scmp.ne.s32.totalorder %s113, %s115
      %p122 = scmp.eq.s32.totalorder %s26, 15
      %p123 = por %p121, %p122
      %p124 = scmp.ne.s32.totalorder %s115, %s116
      %p125 = scmp.eq.s32.totalorder %s26, 0
      %p126 = por %p124, %p125
      %p127 = scmp.ne.s32.totalorder %s115, %s116
      %p128 = scmp.eq.s32.totalorder %s27, 15
      %p129 = por %p127, %p128
      %p131 = scmp.ne.s32.totalorder %s116, %s130
      %p132 = scmp.eq.s32.totalorder %s27, 0
      %p133 = por %p131, %p132
      %s134 = ssub.s32 %s21, %s28
      %p135 = scmp.eq.s32.totalorder %s134, 0
      %s137 = sadd.s32 %s136, 1
      %s138 = scalar_select %p135, %s136, %s137
      %p141 = pneg %p135
      %p142 = scmp.eq.s32.totalorder %s21, 15
      %p143 = por %p141, %p142
      %p144 = scmp.ne.s32.totalorder %s136, %s139
      %p145 = scmp.eq.s32.totalorder %s21, 0
      %p146 = por %p144, %p145
      %p147 = scmp.ne.s32.totalorder %s136, %s139
      %p148 = scmp.eq.s32.totalorder %s26, 15
      %p149 = por %p147, %p148
      %p150 = scmp.ne.s32.totalorder %s139, %s140
      %p151 = scmp.eq.s32.totalorder %s26, 0
      %p152 = por %p150, %p151
      %p153 = scmp.ne.s32.totalorder %s139, %s140
      %p154 = scmp.eq.s32.totalorder %s27, 15
      %p155 = por %p153, %p154
      %p157 = scmp.ne.s32.totalorder %s140, %s156
      %p158 = scmp.eq.s32.totalorder %s27, 0
      %p159 = por %p157, %p158
      %p160 = scmp.le.s32.totalorder 1, %s21
      %p161 = scmp.lt.s32.totalorder %s21, 17
      %p162 = pnand %p160, %p161
      %p163 = pneg %p162
      // Predicated region
      $region9: #{tpu_custom_call.1} parent=5 // pred_check
        _
      $region10: #{tpu_custom_call.1} parent=5 // pred_check_branch
        %165 = sbr.rel (%p162) target = $region12
      $region11: #{tpu_custom_call.1} parent=5 // pred_region
        %s166 = ssub.s32 %s21, 1
        // Predicated region
        $region13: #{tpu_custom_call.1} parent=11 // pred_check
          %p167 = pneg %p42
        $region14: #{tpu_custom_call.1} parent=11 // pred_check_branch
          %169 = sbr.rel (%p167) target = $region16
        $region15: #{tpu_custom_call.1} parent=11 // pred_region
          _
        $region16: #{tpu_custom_call.1} parent=11 // pred_fallthru
          _
        // Predicated region
        $region17: #{tpu_custom_call.1} parent=11 // pred_check
          %p170 = pneg %p63
        $region18: #{tpu_custom_call.1} parent=11 // pred_check_branch
          %172 = sbr.rel (%p170) target = $region20
        $region19: #{tpu_custom_call.1} parent=11 // pred_region
          _
        $region20: #{tpu_custom_call.1} parent=11 // pred_fallthru
          _
        // Predicated region
        $region21: #{tpu_custom_call.1} parent=11 // pred_check
          %p173 = pneg %p84
        $region22: #{tpu_custom_call.1} parent=11 // pred_check_branch
          %175 = sbr.rel (%p173) target = $region24
        $region23: #{tpu_custom_call.1} parent=11 // pred_region
          _
        $region24: #{tpu_custom_call.1} parent=11 // pred_fallthru
          _
        // Predicated region
        $region25: #{tpu_custom_call.1} parent=11 // pred_check
          %p176 = pneg %p105
        $region26: #{tpu_custom_call.1} parent=11 // pred_check_branch
          %178 = sbr.rel (%p176) target = $region28
        $region27: #{tpu_custom_call.1} parent=11 // pred_region
          _
        $region28: #{tpu_custom_call.1} parent=11 // pred_fallthru
          _
        // Predicated region
        $region29: #{tpu_custom_call.1} parent=11 // pred_check
          %p179 = pneg %p126
        $region30: #{tpu_custom_call.1} parent=11 // pred_check_branch
          %181 = sbr.rel (%p179) target = $region32
        $region31: #{tpu_custom_call.1} parent=11 // pred_region
          _
        $region32: #{tpu_custom_call.1} parent=11 // pred_fallthru
          _
      $region12: #{tpu_custom_call.1} parent=5 // pred_fallthru
        _
      %p182 = scmp.lt.s32.totalorder %s21, 16
      // Predicated region
      $region33: #{tpu_custom_call.1} parent=5 // pred_check
        %p183 = pneg %p182
      $region34: #{tpu_custom_call.1} parent=5 // pred_check_branch
        %185 = sbr.rel (%p183) target = $region36
      $region35: #{tpu_custom_call.1} parent=5 // pred_region
        _
      $region36: #{tpu_custom_call.1} parent=5 // pred_fallthru
        _
      %p186 = scmp.le.s32.totalorder 1, %s21
      %p187 = scmp.lt.s32.totalorder %s21, 17
      %p188 = pnand %p186, %p187
      %p189 = pneg %p188
      // Predicated region
      $region37: #{tpu_custom_call.1} parent=5 // pred_check
        _
      $region38: #{tpu_custom_call.1} parent=5 // pred_check_branch
        %191 = sbr.rel (%p188) target = $region40
      $region39: #{tpu_custom_call.1} parent=5 // pred_region
        %s192 = ssub.s32 %s21, 1
        %p193 = pneg %p42
        %p194 = pneg %p39
        %p195 = pneg %p63
        %p196 = pneg %p60
        %p197 = pneg %p84
        %p198 = pneg %p81
        %p199 = pneg %p105
        %p200 = pneg %p102
        %p201 = pneg %p126
        %p202 = pneg %p123
        %p203 = pneg %p152
        %p204 = pneg %p149
        %s205 = sand.u32 %s139, 1
        %s206 = scalar_lea.sflag [#allocation5], %s205
        %s207 = sand.u32 %s139, 1
        %s208 = scalar_lea.vmem [#allocation4], %s207
        %v209 = vld [vmem:[%s1] sm:$0xff]
        %v210 = vld [vmem:[%s1 + $0x8] sm:$0xff]
        %s211 = scalar_lea.vmem %s1, %s26
        %v212 = vld [vmem:[%s211] sm:$0x1]
        %v213 = vld [vmem:[%s2] sm:$0xff]
        %v214 = vld [vmem:[%s2 + $0x8] sm:$0xff]
        %v215 = vld [vmem:[%s3] sm:$0x1]
        %v216 = vld [vmem:[%s4] sm:$0xff]
        %v217 = vld [vmem:[%s4 + $0x8] sm:$0xff]
        %v218 = vld [vmem:[%s5] sm:$0x1]
        %s219 = scalar_lea.vmem %s4, %s26
        %v220 = vld [vmem:[%s219] sm:$0x1]
        %s221 = sld [smem:[#allocation3 + %s26]]
        %vm222 = vcmask 261120
        %v224 = vsel %vm222, %v212, 0
        %v227 = vsel %vm222, %v209, 0
        %v230 = vsel %vm222, %v210, 0
        %232 = vmatprep.subr.mxu0 0.0
        %233 = vmatpush1.xpose.msra.mxu0 0.0
        %234 = vmatprep.subr.mxu0 0.0
        %235 = vmatpush1.xpose.msra.mxu0 0.0
        %236 = vmatprep.subr.mxu0 0.0
        %237 = vmatpush1.xpose.msra.mxu0 0.0
        %238 = vmatprep.subr.mxu0 0.0
        %239 = vmatpush1.xpose.msra.mxu0 0.0
        %240 = vmatprep.subr.mxu0 0.0
        %241 = vmatpush1.xpose.msra.mxu0 0.0
        %242 = vmatprep.subr.mxu0 0.0
        %243 = vmatpush1.xpose.msra.mxu0 0.0
        %244 = vmatprep.subr.mxu0 0.0
        %245 = vmatpush1.xpose.msra.mxu0 0.0
        %246 = vmatprep.subr.mxu0 0.0
        %247 = vmatpush1.xpose.msra.mxu0 0.0
        %248 = vmatprep.subr.mxu0 0.0
        %249 = vmatpush1.xpose.msra.mxu0 0.0
        %250 = vmatprep.subr.mxu0 0.0
        %251 = vmatpush1.xpose.msra.mxu0 0.0
        %252 = vmatprep.subr.mxu0 0.0
        %253 = vmatpush1.xpose.msra.mxu0 0.0
        %254 = vmatprep.subr.mxu0 0.0
        %255 = vmatpush1.xpose.msra.mxu0 0.0
        %256 = vmatprep.subr.mxu0 0.0
        %257 = vmatpush1.xpose.msra.mxu0 0.0
        %258 = vmatprep.subr.mxu0 0.0
        %259 = vmatpush1.xpose.msra.mxu0 0.0
        %260 = vmatprep.subr.mxu0 0.0
        %261 = vmatpush1.xpose.msra.mxu0 %v230
        %262 = vmatprep.subr.mxu0 0.0
        %263 = vmatpush1.xpose.msra.mxu0 %v227
        %264 = vmatprep.subr.mxu0 0.0
        %265 = vmatpush2.xpose.msra.mxu0 0.0
        %266 = vmatprep.subr.mxu0 0.0
        %267 = vmatpush2.xpose.msra.mxu0 0.0
        %268 = vmatprep.subr.mxu0 0.0
        %269 = vmatpush2.xpose.msra.mxu0 0.0
        %270 = vmatprep.subr.mxu0 0.0
        %271 = vmatpush2.xpose.msra.mxu0 0.0
        %272 = vmatprep.subr.mxu0 0.0
        %273 = vmatpush2.xpose.msra.mxu0 0.0
        %274 = vmatprep.subr.mxu0 0.0
        %275 = vmatpush2.xpose.msra.mxu0 0.0
        %276 = vmatprep.subr.mxu0 0.0
        %277 = vmatpush2.xpose.msra.mxu0 0.0
        %278 = vmatprep.subr.mxu0 0.0
        %279 = vmatpush2.xpose.msra.mxu0 0.0
        %280 = vmatprep.subr.mxu0 0.0
        %281 = vmatpush2.xpose.msra.mxu0 0.0
        %282 = vmatprep.subr.mxu0 0.0
        %283 = vmatpush2.xpose.msra.mxu0 0.0
        %284 = vmatprep.subr.mxu0 0.0
        %285 = vmatpush2.xpose.msra.mxu0 0.0
        %286 = vmatprep.subr.mxu0 0.0
        %287 = vmatpush2.xpose.msra.mxu0 0.0
        %288 = vmatprep.subr.mxu0 0.0
        %289 = vmatpush2.xpose.msra.mxu0 0.0
        %290 = vmatprep.subr.mxu0 0.0
        %291 = vmatpush2.xpose.msra.mxu0 0.0
        %292 = vmatprep.subr.mxu0 0.0
        %293 = vmatpush2.xpose.msra.mxu0 0.0
        %294 = vmatprep.subr.mxu0 0.0
        %295 = vmatpush2.xpose.msra.mxu0 0.0
        %296 = vmatprep.mubr.f32.mxu0 0.0
        %297 = vmatmul.mubr.f32.gmra.mxu0 %v224
        %v298 = vpop.f32.mrf.mxu0
        %v299 = vadd.f32 0.0, %v298
        %v300 = vpop.f32.mrf.mxu0
        %301 = vdwg.mxu0
        %v302 = vlaneseq
        %v303 = vshrl.u32 %v302, 7
        %v304 = vsub.s32 0, %v303
        %v305 = vrot.slane %v212, %v304
        %v306 = vmul.f32 %v209, %v305
        %v307 = vmul.f32 %v210, %v305
        %v308 = vsel %vm222, %v306, 0.0
        %309 = vadd.xlane.f32.xlu0 %v308
        %v310 = vpop.xlane.xlu0 %309
        %v311 = vsel %vm222, %v307, 0.0
        %312 = vadd.xlane.f32.xlu0 %v311
        %v313 = vpop.xlane.xlu0 %312
        %315 = vset.pattern.permute.xlu0 0
        %316 = vperm.xlu0 %315, %v220
        %v317 = vpop.permute.xlu0 %316
        %v319 = vadd.f32 %v317, %v218
        %v320 = vmul.f32 %v299, 2.0
        %v321 = vsub.f32 %v319, %v320
        %v322 = vmax.f32 %v321, 0.0
        %v323 = vrsqrt.pop %v322
        %v324 = vmul.f32 %v322, %v323
        %vm325 = vcmp.eq.f32.partialorder %v322, inf
        %v326 = vsel %vm325, %v322, %v324
        %vm327 = vcmp.eq.f32.partialorder %v322, 0.0
        %v328 = vand.u32 %v322, 2147483648
        %v329 = vsel %vm327, %v328, %v326
        %v330 = vlaneseq
        %v331 = vshrl.u32 %v330, 7
        %v332 = vsub.s32 0, %v331
        %v333 = vrot.slane %v220, %v332
        %v334 = vadd.f32 %v333, %v216
        %v335 = vadd.f32 %v333, %v217
        %v336 = vmul.f32 %v310, 2.0
        %v337 = vmul.f32 %v313, 2.0
        %v338 = vsub.f32 %v334, %v336
        %v339 = vsub.f32 %v335, %v337
        %v340 = vmax.f32 %v338, 0.0
        %v341 = vmax.f32 %v339, 0.0
        %v342 = vrsqrt.pop %v340
        %v343 = vmul.f32 %v340, %v342
        %vm344 = vcmp.eq.f32.partialorder %v340, inf
        %v345 = vsel %vm344, %v340, %v343
        %vm346 = vcmp.eq.f32.partialorder %v340, 0.0
        %v347 = vand.u32 %v340, 2147483648
        %v348 = vsel %vm346, %v347, %v345
        %v349 = vrsqrt.pop %v341
        %v350 = vmul.f32 %v341, %v349
        %vm351 = vcmp.eq.f32.partialorder %v341, inf
        %v352 = vsel %vm351, %v341, %v350
        %vm353 = vcmp.eq.f32.partialorder %v341, 0.0
        %v354 = vand.u32 %v341, 2147483648
        %v355 = vsel %vm353, %v354, %v352
        %v356 = vmax.f32 %v220, 1e-24
        %v357 = vrsqrt.pop %v356
        %v358 = vmax.f32 %v218, 1e-24
        %v359 = vrsqrt.pop %v358
        %v360 = vmax.f32 %v216, 1e-24
        %v361 = vmax.f32 %v217, 1e-24
        %v362 = vrsqrt.pop %v360
        %v363 = vrsqrt.pop %v361
        %365 = vset.pattern.permute.xlu0 0
        %366 = vperm.xlu0 %365, %v357
        %v367 = vpop.permute.xlu0 %366
        %v369 = vmul.f32 %v367, %v359
        %v370 = vmul.f32 %v320, %v369
        %v371 = vsub.f32 2.0, %v370
        %v372 = vmax.f32 %v371, 0.0
        %v373 = vrsqrt.pop %v372
        %v374 = vmul.f32 %v372, %v373
        %vm375 = vcmp.eq.f32.partialorder %v372, inf
        %v376 = vsel %vm375, %v372, %v374
        %vm377 = vcmp.eq.f32.partialorder %v372, 0.0
        %v378 = vand.u32 %v372, 2147483648
        %v379 = vsel %vm377, %v378, %v376
        %v380 = vlaneseq
        %v381 = vshrl.u32 %v380, 7
        %v382 = vsub.s32 0, %v381
        %v383 = vrot.slane %v357, %v382
        %v384 = vmul.f32 %v383, %v362
        %v385 = vmul.f32 %v383, %v363
        %v386 = vmul.f32 %v336, %v384
        %v387 = vmul.f32 %v337, %v385
        %v388 = vsub.f32 2.0, %v386
        %v389 = vsub.f32 2.0, %v387
        %v390 = vmax.f32 %v388, 0.0
        %v391 = vmax.f32 %v389, 0.0
        %v392 = vrsqrt.pop %v390
        %v393 = vmul.f32 %v390, %v392
        %vm394 = vcmp.eq.f32.partialorder %v390, inf
        %v395 = vsel %vm394, %v390, %v393
        %vm396 = vcmp.eq.f32.partialorder %v390, 0.0
        %v397 = vand.u32 %v390, 2147483648
        %v398 = vsel %vm396, %v397, %v395
        %v399 = vrsqrt.pop %v391
        %v400 = vmul.f32 %v391, %v399
        %vm401 = vcmp.eq.f32.partialorder %v391, inf
        %v402 = vsel %vm401, %v391, %v400
        %vm403 = vcmp.eq.f32.partialorder %v391, 0.0
        %v404 = vand.u32 %v391, 2147483648
        %v405 = vsel %vm403, %v404, %v402
        %v406 = vlaneseq
        %v407 = vshrl.u32 %v406, 7
        %v408 = vadd.s32 %v407, 8
        %v409 = vstv %s221
        %vm410 = vcmp.eq.s32.totalorder %v213, %v409
        %vm411 = vcmp.eq.s32.totalorder %v214, %v409
        %v412 = vstv %s26
        %vm413 = vcmp.ne.s32.totalorder %v407, %v412
        %vm414 = vcmp.ne.s32.totalorder %v408, %v412
        %vm415 = vmand %vm410, %vm413
        %vm416 = vmand %vm411, %vm414
        %v417 = vsel %vm415, 1, 0
        %v418 = vsel %vm416, 1, 0
        %v419 = vcvt.s32.f32 %v417
        %v420 = vcvt.s32.f32 %v418
        %vm421 = vcmp.ne.s32.totalorder %v215, %v409
        %v422 = vsel %vm421, 1, 0
        %v423 = vcvt.s32.f32 %v422
        %425 = vset.pattern.permute.xlu0 0
        %426 = vperm.xlu0 %425, %v398
        %v427 = vpop.permute.xlu0 %426
        %430 = vset.pattern.permute.xlu0 0
        %431 = vperm.xlu0 %430, %v405
        %v432 = vpop.permute.xlu0 %431
        %v434 = vlaneseq
        %v435 = vshrl.u32 %v434, 7
        %v436 = vsub.s32 0, %v435
        %v437 = vrot.slane %v379, %v436
        %v438 = vsub.f32 %v427, %v437
        %v439 = vsub.f32 %v432, %v437
        %v440 = vadd.f32 %v438, 0.2
        %v441 = vadd.f32 %v439, 0.2
        %v442 = vmax.f32 %v440, 0.0
        %v443 = vmax.f32 %v441, 0.0
        %445 = vset.pattern.permute.xlu0 0
        %446 = vperm.xlu0 %445, %v419
        %v447 = vpop.permute.xlu0 %446
        %450 = vset.pattern.permute.xlu0 0
        %451 = vperm.xlu0 %450, %v420
        %v452 = vpop.permute.xlu0 %451
        %v454 = vmul.f32 %v442, %v447
        %v455 = vmul.f32 %v443, %v452
        %v457 = vlaneseq
        %v458 = vshrl.u32 %v457, 7
        %v459 = vsub.s32 0, %v458
        %v460 = vrot.slane %v423, %v459
        %v462 = vmul.f32 %v454, %v460
        %v463 = vmul.f32 %v455, %v460
        %vm464 = vcmask 130048
        %v465 = vsel %vm464, %v462, 0.0
        %v466 = vsel %vm464, %v463, 0.0
        %v467 = vadd.f32 %v465, %v466
        %468 = vadd.xlane.f32.xlu0 %v467
        %v469 = vpop.xlane.xlu0 %468
        %v470 = vrot.slane %v469, 4
        %v471 = vadd.f32 %v469, %v470
        %v472 = vrot.slane %v471, 2
        %v473 = vadd.f32 %v471, %v472
        %v474 = vrot.slane %v473, 1
        %v475 = vadd.f32 %v473, %v474
        %s476 = vtos %v475
        %vm477 = vcmask 7168
        %v478 = vsel %vm477, %v419, 0.0
        %v479 = vsel %vm477, %v420, 0.0
        %v480 = vadd.f32 %v478, %v479
        %481 = vadd.xlane.f32.xlu0 %v480
        %v482 = vpop.xlane.xlu0 %481
        %v483 = vrot.slane %v482, 4
        %v484 = vadd.f32 %v482, %v483
        %v485 = vrot.slane %v484, 2
        %v486 = vadd.f32 %v484, %v485
        %v487 = vrot.slane %v486, 1
        %v488 = vadd.f32 %v486, %v487
        %s489 = vtos %v488
        %vm490 = vcmask 122880
        %v491 = vsel %vm490, %v423, 0.0
        %492 = vadd.xlane.f32.xlu0 %v491
        %v493 = vpop.xlane.xlu0 %492
        %v494 = vrot.slane %v493, 4
        %v495 = vadd.f32 %v493, %v494
        %v496 = vrot.slane %v495, 2
        %v497 = vadd.f32 %v495, %v496
        %v498 = vrot.slane %v497, 1
        %v499 = vadd.f32 %v497, %v498
        %s500 = vtos %v499
        %s501 = smul.f32 %s489, %s500
        %vm502 = vcmp.gt.s32.totalorder %v213, %v409
        %vm503 = vcmp.gt.s32.totalorder %v214, %v409
        %v504 = vsel %vm502, 1, 0
        %v505 = vsel %vm503, 1, 0
        %v506 = vcvt.s32.f32 %v504
        %v507 = vcvt.s32.f32 %v505
        %vm508 = vcmp.lt.s32.totalorder %v213, %v409
        %vm509 = vcmp.lt.s32.totalorder %v214, %v409
        %v510 = vsel %vm508, 1, 0
        %v511 = vsel %vm509, 1, 0
        %v512 = vcvt.s32.f32 %v510
        %v513 = vcvt.s32.f32 %v511
        %514 = vset.pattern.permute.xlu0 0
        %515 = vperm.xlu0 %514, %v213
        %v516 = vpop.permute.xlu0 %515
        %517 = vset.pattern.permute.xlu0 0
        %518 = vperm.xlu0 %517, %v214
        %v519 = vpop.permute.xlu0 %518
        %v520 = vlaneseq
        %v521 = vshrl.u32 %v520, 7
        %v522 = vsub.s32 0, %v521
        %v523 = vrot.slane %v215, %v522
        %vm524 = vcmp.lt.s32.totalorder %v516, %v523
        %vm525 = vcmp.lt.s32.totalorder %v519, %v523
        %v526 = vsel %vm524, 1, 0
        %v527 = vsel %vm525, 1, 0
        %v528 = vcvt.s32.f32 %v526
        %v529 = vcvt.s32.f32 %v527
        %vm530 = vcmp.gt.s32.totalorder %v516, %v523
        %vm531 = vcmp.gt.s32.totalorder %v519, %v523
        %v532 = vsel %vm530, 1, 0
        %v533 = vsel %vm531, 1, 0
        %v534 = vcvt.s32.f32 %v532
        %v535 = vcvt.s32.f32 %v533
        %537 = vset.pattern.permute.xlu0 0
        %538 = vperm.xlu0 %537, %v506
        %v539 = vpop.permute.xlu0 %538
        %542 = vset.pattern.permute.xlu0 0
        %543 = vperm.xlu0 %542, %v507
        %v544 = vpop.permute.xlu0 %543
        %v546 = vmul.f32 %v539, %v528
        %v547 = vmul.f32 %v544, %v529
        %549 = vset.pattern.permute.xlu0 0
        %550 = vperm.xlu0 %549, %v512
        %v551 = vpop.permute.xlu0 %550
        %554 = vset.pattern.permute.xlu0 0
        %555 = vperm.xlu0 %554, %v513
        %v556 = vpop.permute.xlu0 %555
        %v558 = vmul.f32 %v551, %v534
        %v559 = vmul.f32 %v556, %v535
        %v560 = vadd.f32 %v546, %v558
        %v561 = vadd.f32 %v547, %v559
        %563 = vset.pattern.permute.xlu0 0
        %564 = vperm.xlu0 %563, %v348
        %v565 = vpop.permute.xlu0 %564
        %568 = vset.pattern.permute.xlu0 0
        %569 = vperm.xlu0 %568, %v355
        %v570 = vpop.permute.xlu0 %569
        %v572 = vlaneseq
        %v573 = vshrl.u32 %v572, 7
        %v574 = vsub.s32 0, %v573
        %v575 = vrot.slane %v329, %v574
        %v576 = vsub.f32 %v565, %v575
        %v577 = vsub.f32 %v570, %v575
        %v578 = vadd.f32 %v576, 0.2
        %v579 = vadd.f32 %v577, 0.2
        %v580 = vmax.f32 %v578, 0.0
        %v581 = vmax.f32 %v579, 0.0
        %v582 = vmul.f32 %v580, %v560
        %v583 = vmul.f32 %v581, %v561
        %v584 = vsel %vm464, %v582, 0.0
        %v585 = vsel %vm464, %v583, 0.0
        %v586 = vadd.f32 %v584, %v585
        %587 = vadd.xlane.f32.xlu0 %v586
        %v588 = vpop.xlane.xlu0 %587
        %v589 = vrot.slane %v588, 4
        %v590 = vadd.f32 %v588, %v589
        %v591 = vrot.slane %v590, 2
        %v592 = vadd.f32 %v590, %v591
        %v593 = vrot.slane %v592, 1
        %v594 = vadd.f32 %v592, %v593
        %s595 = vtos %v594
        %v596 = vsel %vm464, %v560, 0.0
        %v597 = vsel %vm464, %v561, 0.0
        %v598 = vadd.f32 %v596, %v597
        %599 = vadd.xlane.f32.xlu0 %v598
        %v600 = vpop.xlane.xlu0 %599
        %v601 = vrot.slane %v600, 4
        %v602 = vadd.f32 %v600, %v601
        %v603 = vrot.slane %v602, 2
        %v604 = vadd.f32 %v602, %v603
        %v605 = vrot.slane %v604, 1
        %v606 = vadd.f32 %v604, %v605
        %s607 = vtos %v606
        %v608 = vlaneseq
        %v609 = vand.u32 %v608, 127
        %vm610 = vcmp.eq.s32.totalorder %v609, 0
        %v611 = vstv %s476
        %v612 = vsel %vm610, %v611, 0.0
        %vm613 = vcmp.eq.s32.totalorder %v609, 1
        %v614 = vstv %s501
        %v615 = vsel %vm613, %v614, 0.0
        %v616 = vadd.f32 %v612, %v615
        %vm617 = vcmp.eq.s32.totalorder %v609, 2
        %v618 = vstv %s595
        %v619 = vsel %vm617, %v618, 0.0
        %v620 = vadd.f32 %v616, %v619
        %vm621 = vcmp.eq.s32.totalorder %v609, 3
        %v622 = vstv %s607
        %v623 = vsel %vm621, %v622, 0.0
        %v624 = vadd.f32 %v620, %v623
        %625 = vst [vmem:[%s208] sm:$0x1] %v624
        %s626 = sand.u32 %s139, 1
        %s627 = scalar_lea.sflag [#allocation5], %s626
        %s628 = sand.u32 %s139, 1
        %s629 = scalar_lea.vmem [#allocation4], %s628
        // Predicated region
        $region41: #{tpu_custom_call.1} parent=39 // pred_check
          %p630 = pneg %p149
        $region42: #{tpu_custom_call.1} parent=39 // pred_check_branch
          %632 = sbr.rel (%p630) target = $region44
        $region43: #{tpu_custom_call.1} parent=39 // pred_region
          %s634 = ssub.s32 16, 16
          %635 = vsyncadd %s627, %s634
          %s636 = smul.addr %s26, 16
          %s637 = scalar_lea.hbm %s6, %s636
          %s639 = sshll.u32 %s629, 4
          %s640 = int_to_ptr.vmem [resolvable:$true] %s639
          %642 = dma.vmem_to_hbm [thread:$0]  %s640, 16, %s637, %s627
        $region44: #{tpu_custom_call.1} parent=39 // pred_fallthru
          _
      $region40: #{tpu_custom_call.1} parent=5 // pred_fallthru
        _
      %p643 = scmp.le.s32.totalorder 2, %s21
      // Predicated region
      $region45: #{tpu_custom_call.1} parent=5 // pred_check
        %p644 = pneg %p643
      $region46: #{tpu_custom_call.1} parent=5 // pred_check_branch
        %646 = sbr.rel (%p644) target = $region48
      $region47: #{tpu_custom_call.1} parent=5 // pred_region
        %s647 = ssub.s32 %s21, 2
        // Predicated region
        $region49: #{tpu_custom_call.1} parent=47 // pred_check
          %p648 = pneg %p155
        $region50: #{tpu_custom_call.1} parent=47 // pred_check_branch
          %650 = sbr.rel (%p648) target = $region52
        $region51: #{tpu_custom_call.1} parent=47 // pred_region
          %s651 = sand.u32 %s140, 1
          %s652 = scalar_lea.sflag [#allocation5], %s651
          %s653 = sand.u32 %s140, 1
          %s654 = scalar_lea.vmem [#allocation4], %s653
          %655 = dma.done %s652, 16
        $region52: #{tpu_custom_call.1} parent=47 // pred_fallthru
          _
      $region48: #{tpu_custom_call.1} parent=5 // pred_fallthru
        _
    $region6: #{tpu_custom_call.1} parent=1 // loop_footer
      %s25 = sadd.s32 1, %s21
    $region7: #{tpu_custom_call.1} parent=1 // loop_footer_branch
      %20 = sbr.rel target = $region3
    $region8: #{tpu_custom_call.1} parent=1 // loop_exit
      _
    %656 = vsyncpa [#allocation5], 1
    %s657 = scalar_lea.sflag [#allocation5], 1
    %658 = vsyncpa %s657, 1

</llo_original>
